<compile_context>
chip_gen: v7x
topology: tpu7x:2x2x1
jax: 0.10.0
libtpu: 0.0.40
codegen_flags: <defaults>
</compile_context>

<pallas_src>
import jax
import jax.numpy as jnp
from jax.experimental import pallas as pl
from jax.experimental.pallas import tpu as pltpu


# ------------------------------ kernels ------------------------------------ #

def _se_t_fused_kernel(x_ref, w1t_ref, w2_ref, o_ref):
    # x_ref: (Bb, C, T, HW); w1t_ref, w2_ref: (T, T//r) in f32.
    bb, c, t, hw = x_ref.shape
    inv_n = 1.0 / float(c * hw)

    # Temporal pool (f32-accumulated): sum over C (VPU slab adds), then the
    # lane axis (one XLU reduce).  T stays on the sublane axis.  The load
    # feeding the reduce is consumed directly, so no named f32 copy of the
    # block is materialized.
    pooled = jnp.sum(jnp.sum(x_ref[...], axis=1, dtype=jnp.float32),
                     axis=-1, keepdims=True) * inv_n                      # (Bb, T, 1)

    # Tiny FC stack (T -> T/r -> T) as broadcast-multiply + reduce on VPU/XLU.
    h = jnp.maximum(
        jnp.sum(pooled * w1t_ref[...][None, :, :], axis=1, keepdims=True),
        0.0)                                                              # (Bb, 1, T/r)
    s = jax.nn.sigmoid(
        jnp.sum(h * w2_ref[...][None, :, :], axis=-1, keepdims=True))     # (Bb, T, 1)

    # out = x * (s + 0.5) == x + x*(s - 0.5) up to 1 ulp: a single fused vmul
    # on the full-block store path; x_ref is re-read so the cast fuses per-vreg.
    scale = (s + 0.5)[:, None, :, :]                                      # (Bb, 1, T, 1)
    o_ref[...] = (x_ref[...].astype(jnp.float32) * scale).astype(o_ref.dtype)


def _pool_sum_kernel(x_ref, sum_ref):
    # x_ref: (1, Ct, T, HWt); sum_ref: (1, T, 1) f32, resident across (ci, hi).
    first = (pl.program_id(1) == 0) & (pl.program_id(2) == 0)

    @pl.when(first)
    def _():
        sum_ref[...] = jnp.zeros_like(sum_ref)

    part = jnp.sum(jnp.sum(x_ref[...], axis=1, dtype=jnp.float32),
                   axis=-1, keepdims=True)                                # (1, T, 1)
    sum_ref[...] += part


def _rescale_kernel(scale_ref, x_ref, o_ref):
    # scale_ref: (1, T, 1) f32; x_ref/o_ref: (1, Ct, T, HWt).
    sc = scale_ref[...][:, None, :, :]                                    # (1, 1, T, 1)
    o_ref[...] = (x_ref[...].astype(jnp.float32) * sc).astype(o_ref.dtype)


# ------------------------------ helpers ------------------------------------ #

def _divisors(n):
    ds, d = set(), 1
    while d * d <= n:
        if n % d == 0:
            ds.add(d)
            ds.add(n // d)
        d += 1
    return sorted(ds)


def _pick_tiles(c, hw, bytes_per_elem, max_block_bytes):
    """Pick (ct, hwt) dividing (c, hw) with ct*hwt*bytes_per_elem <= budget.

    Prefers lane-dense HW tiles (multiples of 128) and the largest block that
    fits, tie-broken toward wider HW tiles (longer contiguous DMAs).
    """
    elems_budget = max(1, max_block_bytes // bytes_per_elem)
    hw_divs = _divisors(hw)
    lane_divs = [d for d in hw_divs if d % 128 == 0] or hw_divs
    c_divs = _divisors(c)
    best = None
    for hwt in lane_divs:
        for ct in c_divs:
            if ct * hwt <= elems_budget:
                key = (ct * hwt, hwt)
                if best is None or key > best[0]:
                    best = (key, ct, hwt)
    if best is None:
        # TODO(synk): pathological shapes (huge prime C and H*W) -- fall back to
        # the smallest legal tile even though it exceeds the requested budget.
        return min(c_divs), min(lane_divs)
    return best[1], best[2]


def _vmem_capacity_bytes():
    try:
        return int(pltpu.get_tpu_info().vmem_capacity_bytes)
    except Exception:
        return 64 << 20  # conservative default (v7x)


# ------------------------------ wrappers ------------------------------------ #

def _se_fused(x_r, w1t, w2f, bb, vmem_cap):
    b, c, t, hw = x_r.shape
    tr = w1t.shape[1]
    itemsize = x_r.dtype.itemsize
    block_bytes = bb * c * t * hw * itemsize
    vmem_limit = int(min(max(4 * block_bytes + (2 << 20), 8 << 20),
                         (9 * vmem_cap) // 10))
    cost = pl.CostEstimate(flops=3 * x_r.size,
                           transcendentals=b * t,
                           bytes_accessed=2 * x_r.size * itemsize)
    return pl.pallas_call(
        _se_t_fused_kernel,
        out_shape=jax.ShapeDtypeStruct((b, c, t, hw), x_r.dtype),
        grid_spec=pltpu.PrefetchScalarGridSpec(
            num_scalar_prefetch=0,
            grid=(b // bb,),
            in_specs=[
                pl.BlockSpec((bb, c, t, hw), lambda i: (i, 0, 0, 0)),
                pl.BlockSpec((t, tr), lambda i: (0, 0)),
                pl.BlockSpec((t, tr), lambda i: (0, 0)),
            ],
            out_specs=pl.BlockSpec((bb, c, t, hw), lambda i: (i, 0, 0, 0)),
        ),
        compiler_params=pltpu.CompilerParams(
            dimension_semantics=("parallel",),
            vmem_limit_bytes=vmem_limit,
        ),
        cost_estimate=cost,
    )(x_r, w1t, w2f)


def _se_two_pass(x_r, w1, w2, ct, hwt, vmem_cap):
    b, c, t, hw = x_r.shape
    itemsize = x_r.dtype.itemsize
    tile_bytes = ct * t * hwt * itemsize
    nc, nh = c // ct, hw // hwt
    vmem_hi = (9 * vmem_cap) // 10

    # Pass 1: tiled temporal pool; per-(b, t) sums accumulate in the resident
    # f32 output block across the C/HW reduction axes.
    sums = pl.pallas_call(
        _pool_sum_kernel,
        out_shape=jax.ShapeDtypeStruct((b, t, 1), jnp.float32),
        grid_spec=pltpu.PrefetchScalarGridSpec(
            num_scalar_prefetch=0,
            grid=(b, nc, nh),
            in_specs=[pl.BlockSpec((1, ct, t, hwt),
                                   lambda bi, ci, hi: (bi, ci, 0, hi))],
            out_specs=pl.BlockSpec((1, t, 1), lambda bi, ci, hi: (bi, 0, 0)),
        ),
        compiler_params=pltpu.CompilerParams(
            dimension_semantics=("parallel", "arbitrary", "arbitrary"),
            vmem_limit_bytes=int(min(max(2 * tile_bytes + (2 << 20), 8 << 20),
                                     vmem_hi)),
        ),
        cost_estimate=pl.CostEstimate(flops=x_r.size, transcendentals=0,
                                      bytes_accessed=x_r.size * itemsize),
    )(x_r)

    # Tiny FC stack on the (B, T) pooled means -- negligible, plain XLA.
    pooled = sums[:, :, 0] * (1.0 / float(c * hw))                        # (B, T)
    hmid = jnp.maximum(pooled @ jnp.asarray(w1, jnp.float32).T, 0.0)      # (B, T/r)
    scale = jax.nn.sigmoid(hmid @ jnp.asarray(w2, jnp.float32).T) + 0.5   # (B, T)
    scale = scale.reshape(b, t, 1).astype(jnp.float32)

    # Pass 2: tiled rescale, fully parallel.
    return pl.pallas_call(
        _rescale_kernel,
        out_shape=jax.ShapeDtypeStruct((b, c, t, hw), x_r.dtype),
        grid_spec=pltpu.PrefetchScalarGridSpec(
            num_scalar_prefetch=0,
            grid=(b, nc, nh),
            in_specs=[
                pl.BlockSpec((1, t, 1), lambda bi, ci, hi: (bi, 0, 0)),
                pl.BlockSpec((1, ct, t, hwt),
                             lambda bi, ci, hi: (bi, ci, 0, hi)),
            ],
            out_specs=pl.BlockSpec((1, ct, t, hwt),
                                   lambda bi, ci, hi: (bi, ci, 0, hi)),
        ),
        compiler_params=pltpu.CompilerParams(
            dimension_semantics=("parallel", "parallel", "parallel"),
            vmem_limit_bytes=int(min(max(4 * tile_bytes + (2 << 20), 8 << 20),
                                     vmem_hi)),
        ),
        cost_estimate=pl.CostEstimate(flops=x_r.size, transcendentals=0,
                                      bytes_accessed=2 * x_r.size * itemsize),
    )(scale, x_r)


def se_layer_t(x, w1, w2, *, block_bytes_cap=None):
    """SELayerT forward.

    x:  (B, C, T, H, W) video tensor.
    w1: (T//r, T)  -- nn.Linear(T, T//r, bias=False) weight.
    w2: (T, T//r)  -- nn.Linear(T//r, T, bias=False) weight.
    block_bytes_cap: optional override of the per-block byte budget
      (testing / tuning); defaults to ~1/4 of 75% of VMEM capacity.
    """
    b, c, t, hh, ww = x.shape
    hw = hh * ww
    itemsize = x.dtype.itemsize
    slab_bytes = c * t * hw * itemsize          # one batch worth of x

    # Free reshape (merges H and W): no transpose, no extra HBM pass.
    # TODO(synk): if H*W is not a multiple of 128 the full-extent lane block is
    # still legal but stores become masked vst.msk; a lane-dense repack would
    # cost an extra full HBM pass, so we accept the masked stores here.
    x_r = x.reshape(b, c, t, hw)

    # Generation-aware VMEM budget (v5e/v6e: 128 MiB, v7x: 64 MiB).
    vmem_cap = _vmem_capacity_bytes()
    budget = (3 * vmem_cap) // 4
    cap = budget // 4                           # in + out blocks, double-buffered
    if block_bytes_cap is not None:
        cap = min(cap, int(block_bytes_cap))

    if slab_bytes <= cap:
        # Fused single-pass path: pack Bb batches per grid step so each block is
        # ~1-8 MiB, while keeping >=4 grid steps when B allows (v7x megacore:
        # >=2 pipelined steps per TensorCore).
        target = 4 << 20
        bb = max(1, min(cap, target) // slab_bytes)
        if b >= 2:
            bb = min(bb, max(1, b // 4))
        bb = max(1, min(bb, b))
        while b % bb:
            bb -= 1
        w1t = jnp.asarray(w1, jnp.float32).T    # (T, T//r)
        w2f = jnp.asarray(w2, jnp.float32)      # (T, T//r)
        out_r = _se_fused(x_r, w1t, w2f, bb, vmem_cap)
    else:
        # Two-pass fallback for slabs that do not fit the double-buffered VMEM
        # budget (2 reads + 1 write of x, but pipelining is preserved).
        ct, hwt = _pick_tiles(c, hw, t * itemsize, cap)
        out_r = _se_two_pass(x_r, w1, w2, ct, hwt, vmem_cap)

    return out_r.reshape(b, c, t, hh, ww)


# ------------------------------ reference / demo ---------------------------- #

def _reference(x, w1, w2):
    b, c, t, hh, ww = x.shape
    y = jnp.mean(jnp.transpose(x, (0, 2, 1, 3, 4)), axis=(2, 3, 4))  # (b, t)
    y = jnp.maximum(y @ w1.T, 0.0)
    y = jax.nn.sigmoid(y @ w2.T)
    y = y.reshape(b, 1, t, 1, 1) - 0.5
    return x + x * y


if __name__ == "__main__":
    # SELayerT(channel=T, reduction=2): the "channel" of the SE layer is the
    # temporal dimension T of the video tensor.
    B, C, T, H, W = 2, 4, 8, 16, 16
    reduction = 2

    key = jax.random.PRNGKey(0)
    kx, k1, k2, kb = jax.random.split(key, 4)
    x = jax.random.normal(kx, (B, C, T, H, W), dtype=jnp.float32)
    # Shapes match nn.Linear(T, T//2, bias=False) and nn.Linear(T//2, T, bias=False).
    w1 = 0.3 * jax.random.normal(k1, (T // reduction, T), dtype=jnp.float32)
    w2 = 0.3 * jax.random.normal(k2, (T, T // reduction), dtype=jnp.float32)

    ref = _reference(x, w1, w2)

    # 1) Fused single-pass path.
    out = jax.block_until_ready(se_layer_t(x, w1, w2))
    assert out.shape == x.shape
    assert jnp.allclose(out, ref, atol=1e-5, rtol=1e-5), "fused path mismatch"

    # 2) Tiled two-pass fallback (forced via a tiny block budget) -- the path
    #    taken when a per-batch slab would not fit VMEM (e.g. large C*H*W on
    #    v7x's 64 MiB).
    out2 = jax.block_until_ready(se_layer_t(x, w1, w2, block_bytes_cap=8 << 10))
    assert jnp.allclose(out2, ref, atol=1e-5, rtol=1e-5), "two-pass path mismatch"

    # 3) Multi-batch-per-block fused path (Bb > 1) with a larger batch.
    xb = jax.random.normal(kb, (8, 2, T, H, W), dtype=jnp.float32)
    out3 = jax.block_until_ready(se_layer_t(xb, w1, w2))
    assert jnp.allclose(out3, _reference(xb, w1, w2), atol=1e-5, rtol=1e-5), \
        "batch-packed fused path mismatch"

    print("KERNEL_OK")
</pallas_src>

<mosaic_0001>
module attributes {stable_mosaic.version = 11 : i64} {
  func.func @_se_t_fused_kernel(%arg0: i32, %arg1: memref<1x4x8x256xf32, #tpu.memory_space<vmem>>, %arg2: memref<8x4xf32, #tpu.memory_space<vmem>>, %arg3: memref<8x4xf32, #tpu.memory_space<vmem>>, %arg4: memref<1x4x8x256xf32, #tpu.memory_space<vmem>>) attributes {dimension_semantics = [#tpu.dimension_semantics<parallel>], iteration_bounds = array<i64: 2>, scalar_prefetch = 0 : i64, scratch_operands = 0 : i64, tpu.core_type = #tpu.core_type<tc>, window_params = [{transform_indices = @transform_0, window_bounds = array<i64: 1, 4, 8, 256>}, {pipeline_mode = #tpu.pipeline_mode<synchronous>, transform_indices = @transform_1, window_bounds = array<i64: 8, 4>}, {pipeline_mode = #tpu.pipeline_mode<synchronous>, transform_indices = @transform_2, window_bounds = array<i64: 8, 4>}, {transform_indices = @transform_3, window_bounds = array<i64: 1, 4, 8, 256>}]} {
    %c0 = arith.constant 0 : index
    %c0_0 = arith.constant 0 : index
    %c0_1 = arith.constant 0 : index
    %c0_2 = arith.constant 0 : index
    %0 = vector.load %arg1[%c0, %c0_0, %c0_1, %c0_2] : memref<1x4x8x256xf32, #tpu.memory_space<vmem>>, vector<1x4x8x256xf32>
    %cst = arith.constant dense<0.000000e+00> : vector<1x8x256xf32>
    %1 = vector.multi_reduction <add>, %0, %cst [1] : vector<1x4x8x256xf32> to vector<1x8x256xf32>
    %cst_3 = arith.constant dense<0.000000e+00> : vector<1x8xf32>
    %2 = vector.multi_reduction <add>, %1, %cst_3 [2] : vector<1x8x256xf32> to vector<1x8xf32>
    %3 = vector.shape_cast %2 : vector<1x8xf32> to vector<1x8x1xf32>
    %cst_4 = arith.constant 9.765625E-4 : f32
    %4 = vector.broadcast %cst_4 : f32 to vector<1x8x1xf32>
    %5 = arith.mulf %3, %4 : vector<1x8x1xf32>
    %c0_5 = arith.constant 0 : index
    %c0_6 = arith.constant 0 : index
    %6 = vector.load %arg2[%c0_5, %c0_6] : memref<8x4xf32, #tpu.memory_space<vmem>>, vector<8x4xf32>
    %7 = vector.shape_cast %6 : vector<8x4xf32> to vector<1x8x4xf32>
    %8 = vector.broadcast %5 : vector<1x8x1xf32> to vector<1x8x4xf32>
    %9 = arith.mulf %8, %7 : vector<1x8x4xf32>
    %cst_7 = arith.constant dense<0.000000e+00> : vector<1x4xf32>
    %10 = vector.multi_reduction <add>, %9, %cst_7 [1] : vector<1x8x4xf32> to vector<1x4xf32>
    %11 = vector.shape_cast %10 : vector<1x4xf32> to vector<1x1x4xf32>
    %cst_8 = arith.constant 0.000000e+00 : f32
    %12 = vector.broadcast %cst_8 : f32 to vector<1x1x4xf32>
    %13 = arith.maximumf %11, %12 : vector<1x1x4xf32>
    %c0_9 = arith.constant 0 : index
    %c0_10 = arith.constant 0 : index
    %14 = vector.load %arg3[%c0_9, %c0_10] : memref<8x4xf32, #tpu.memory_space<vmem>>, vector<8x4xf32>
    %15 = vector.shape_cast %14 : vector<8x4xf32> to vector<1x8x4xf32>
    %16 = vector.broadcast %13 : vector<1x1x4xf32> to vector<1x8x4xf32>
    %17 = arith.mulf %16, %15 : vector<1x8x4xf32>
    %cst_11 = arith.constant dense<0.000000e+00> : vector<1x8xf32>
    %18 = vector.multi_reduction <add>, %17, %cst_11 [2] : vector<1x8x4xf32> to vector<1x8xf32>
    %19 = vector.shape_cast %18 : vector<1x8xf32> to vector<1x8x1xf32>
    %20 = arith.negf %19 : vector<1x8x1xf32>
    %21 = math.exp %20 : vector<1x8x1xf32>
    %cst_12 = arith.constant 1.000000e+00 : f32
    %22 = vector.broadcast %cst_12 : f32 to vector<1x8x1xf32>
    %23 = arith.addf %22, %21 : vector<1x8x1xf32>
    %24 = arith.divf %22, %23 : vector<1x8x1xf32>
    %cst_13 = arith.constant 5.000000e-01 : f32
    %25 = vector.broadcast %cst_13 : f32 to vector<1x8x1xf32>
    %26 = arith.addf %24, %25 : vector<1x8x1xf32>
    %27 = vector.shape_cast %26 : vector<1x8x1xf32> to vector<1x1x8x1xf32>
    %c0_14 = arith.constant 0 : index
    %c0_15 = arith.constant 0 : index
    %c0_16 = arith.constant 0 : index
    %c0_17 = arith.constant 0 : index
    %28 = vector.load %arg1[%c0_14, %c0_15, %c0_16, %c0_17] : memref<1x4x8x256xf32, #tpu.memory_space<vmem>>, vector<1x4x8x256xf32>
    %29 = vector.broadcast %27 : vector<1x1x8x1xf32> to vector<1x4x8x256xf32>
    %30 = arith.mulf %28, %29 : vector<1x4x8x256xf32>
    %c0_18 = arith.constant 0 : index
    %c0_19 = arith.constant 0 : index
    %c0_20 = arith.constant 0 : index
    %c0_21 = arith.constant 0 : index
    %31 = vector.load %arg4[%c0_18, %c0_19, %c0_20, %c0_21] : memref<1x4x8x256xf32, #tpu.memory_space<vmem>>, vector<1x4x8x256xf32>
    tpu.vector_store %arg4[%c0_18, %c0_19, %c0_20, %c0_21], %30 {strides = array<i32>} : memref<1x4x8x256xf32, #tpu.memory_space<vmem>>, vector<1x4x8x256xf32>,
    return
  }
  func.func @transform_0(%arg0: i32) -> (i32, i32, i32, i32) {
    %c0_i32 = arith.constant 0 : i32
    %c0_i32_0 = arith.constant 0 : i32
    %c0_i32_1 = arith.constant 0 : i32
    %c0_i32_2 = arith.constant 0 : i32
    return %arg0, %c0_i32, %c0_i32_0, %c0_i32_1 : i32, i32, i32, i32
  }
  func.func @transform_1(%arg0: i32) -> (i32, i32) {
    %c0_i32 = arith.constant 0 : i32
    %c0_i32_0 = arith.constant 0 : i32
    %c0_i32_1 = arith.constant 0 : i32
    return %c0_i32, %c0_i32_0 : i32, i32
  }
  func.func @transform_2(%arg0: i32) -> (i32, i32) {
    %c0_i32 = arith.constant 0 : i32
    %c0_i32_0 = arith.constant 0 : i32
    %c0_i32_1 = arith.constant 0 : i32
    return %c0_i32, %c0_i32_0 : i32, i32
  }
  func.func @transform_3(%arg0: i32) -> (i32, i32, i32, i32) {
    %c0_i32 = arith.constant 0 : i32
    %c0_i32_0 = arith.constant 0 : i32
    %c0_i32_1 = arith.constant 0 : i32
    %c0_i32_2 = arith.constant 0 : i32
    return %arg0, %c0_i32, %c0_i32_0, %c0_i32_1 : i32, i32, i32, i32
  }
}

</mosaic_0001>

<llo_original>
// kernel: tpu_custom_call.1
$region0: #{tpu_custom_call.1}
  #allocation0 [shape = 'u32[]', space=smem, size = 0x4, offset = 0x4, fixed_abs, tag = 'smem constant byte address 0x4 - core index']
  #allocation1 [shape = 'u32[144,128]{1,0:T(1,128)}', space=vmem, size = 0x12000, scoped, tag = 'internal scratch']
  %s0 = inlined_call_operand.hbm [shape: f32[2,4,8,256], index: 0, kind: input, shape index: {}]
  %s1 = inlined_call_operand.vmem [shape: f32[8,4], index: 1, kind: input, shape index: {}]
  %s2 = inlined_call_operand.vmem [shape: f32[8,4], index: 2, kind: input, shape index: {}]
  %s3 = inlined_call_operand.hbm [shape: f32[2,4,8,256], index: 3, kind: output, shape index: {}]
  %s4 = sld [smem:[#allocation0]]
  $region49: #{tpu_custom_call.1} parent=0
    _
  %s6 = ssub.s32 1, %s4
  %s7 = scalar_select 0, %s6, %s4
  $region1: #{tpu_custom_call.1} parent=0
    #allocation2 [shape = 'u8[65536]{0}', space=vmem, size = 0x10000, scoped, tag = 'input window, operand 0']
    #allocation3 [shape = 's32[2]{0}', space=sflag, size = 0x8, scoped, tag = 'scoped memory for tpu_custom_call.1']
    #allocation4 [shape = 's32[2]{0}', space=sflag, size = 0x8, scoped, tag = 'scoped memory for tpu_custom_call.1']
    #allocation5 [shape = 'u8[65536]{0}', space=vmem, size = 0x10000, scoped, tag = 'output window, operand 0']
    %8 = vsyncpa [#allocation3], 0
    %s9 = scalar_lea.sflag [#allocation3], 1
    %10 = vsyncpa %s9, 0
    %11 = vsyncpa [#allocation4], 0
    %s12 = scalar_lea.sflag [#allocation4], 1
    %13 = vsyncpa %s12, 0
    loop: start=0, step=1, limit=4
    $region2: #{tpu_custom_call.1} parent=1 // loop_pre_header
      _
    $region3: #{tpu_custom_call.1} parent=1 // loop_header
      %s15 = sphi 0, %s19
      %p16 = scmp.ge.s32.totalorder %s15, 4
      %s25 = sphi 0, %s27
      %s28 = sphi 0, %s25
      %s29 = sphi 0, %s28
      %s45 = sphi 0, %s29
      %s49 = sphi 0, %s49
      %s51 = sphi 0, %s49
      %s52 = sphi 0, %s51
      %s66 = sphi 0, %s52
      %s70 = sphi 0, %s70
      %s72 = sphi 0, %s70
      %s73 = sphi 0, %s72
      %s87 = sphi 0, %s73
      %s93 = sphi 0, %s95
      %s96 = sphi 0, %s93
      %s97 = sphi 0, %s96
      %s113 = sphi 0, %s97
    $region4: #{tpu_custom_call.1} parent=1 // loop_header_branch
      %18 = sbr.rel (%p16) target = $region8
    $region5: #{tpu_custom_call.1} parent=1 // loop_body
      %s20 = ssub.s32 %s15, 1
      %s21 = ssub.s32 %s15, 2
      %s22 = sadd.s32 %s15, 1
      %s23 = ssub.s32 %s15, %s22
      %p24 = scmp.eq.s32.totalorder %s23, 0
      %s26 = sadd.s32 %s25, 1
      %s27 = scalar_select %p24, %s25, %s26
      %p30 = pneg %p24
      %p31 = scmp.eq.s32.totalorder %s15, 1
      %p32 = por %p30, %p31
      %p33 = scmp.ne.s32.totalorder %s25, %s28
      %p34 = scmp.eq.s32.totalorder %s15, 0
      %p35 = por %p33, %p34
      %p36 = scmp.ne.s32.totalorder %s25, %s28
      %p37 = scmp.eq.s32.totalorder %s20, 1
      %p38 = por %p36, %p37
      %p39 = scmp.ne.s32.totalorder %s28, %s29
      %p40 = scmp.eq.s32.totalorder %s20, 0
      %p41 = por %p39, %p40
      %p42 = scmp.ne.s32.totalorder %s28, %s29
      %p43 = scmp.eq.s32.totalorder %s21, 1
      %p44 = por %p42, %p43
      %p46 = scmp.ne.s32.totalorder %s29, %s45
      %p47 = scmp.eq.s32.totalorder %s21, 0
      %p48 = por %p46, %p47
      %s50 = sadd.s32 %s49, 1
      %p53 = scmp.eq.s32.totalorder %s15, 1
      %p54 = scmp.ne.s32.totalorder %s49, %s51
      %p55 = scmp.eq.s32.totalorder %s15, 0
      %p56 = por %p54, %p55
      %p57 = scmp.ne.s32.totalorder %s49, %s51
      %p58 = scmp.eq.s32.totalorder %s20, 1
      %p59 = por %p57, %p58
      %p60 = scmp.ne.s32.totalorder %s51, %s52
      %p61 = scmp.eq.s32.totalorder %s20, 0
      %p62 = por %p60, %p61
      %p63 = scmp.ne.s32.totalorder %s51, %s52
      %p64 = scmp.eq.s32.totalorder %s21, 1
      %p65 = por %p63, %p64
      %p67 = scmp.ne.s32.totalorder %s52, %s66
      %p68 = scmp.eq.s32.totalorder %s21, 0
      %p69 = por %p67, %p68
      %s71 = sadd.s32 %s70, 1
      %p74 = scmp.eq.s32.totalorder %s15, 1
      %p75 = scmp.ne.s32.totalorder %s70, %s72
      %p76 = scmp.eq.s32.totalorder %s15, 0
      %p77 = por %p75, %p76
      %p78 = scmp.ne.s32.totalorder %s70, %s72
      %p79 = scmp.eq.s32.totalorder %s20, 1
      %p80 = por %p78, %p79
      %p81 = scmp.ne.s32.totalorder %s72, %s73
      %p82 = scmp.eq.s32.totalorder %s20, 0
      %p83 = por %p81, %p82
      %p84 = scmp.ne.s32.totalorder %s72, %s73
      %p85 = scmp.eq.s32.totalorder %s21, 1
      %p86 = por %p84, %p85
      %p88 = scmp.ne.s32.totalorder %s73, %s87
      %p89 = scmp.eq.s32.totalorder %s21, 0
      %p90 = por %p88, %p89
      %s91 = ssub.s32 %s15, %s22
      %p92 = scmp.eq.s32.totalorder %s91, 0
      %s94 = sadd.s32 %s93, 1
      %s95 = scalar_select %p92, %s93, %s94
      %p98 = pneg %p92
      %p99 = scmp.eq.s32.totalorder %s15, 1
      %p100 = por %p98, %p99
      %p101 = scmp.ne.s32.totalorder %s93, %s96
      %p102 = scmp.eq.s32.totalorder %s15, 0
      %p103 = por %p101, %p102
      %p104 = scmp.ne.s32.totalorder %s93, %s96
      %p105 = scmp.eq.s32.totalorder %s20, 1
      %p106 = por %p104, %p105
      %p107 = scmp.ne.s32.totalorder %s96, %s97
      %p108 = scmp.eq.s32.totalorder %s20, 0
      %p109 = por %p107, %p108
      %p110 = scmp.ne.s32.totalorder %s96, %s97
      %p111 = scmp.eq.s32.totalorder %s21, 1
      %p112 = por %p110, %p111
      %p114 = scmp.ne.s32.totalorder %s97, %s113
      %p115 = scmp.eq.s32.totalorder %s21, 0
      %p116 = por %p114, %p115
      %p117 = scmp.le.s32.totalorder 1, %s15
      %p118 = scmp.lt.s32.totalorder %s15, 3
      %p119 = pnand %p117, %p118
      %p120 = pneg %p119
      // Predicated region
      $region9: #{tpu_custom_call.1} parent=5 // pred_check
        _
      $region10: #{tpu_custom_call.1} parent=5 // pred_check_branch
        %122 = sbr.rel (%p119) target = $region12
      $region11: #{tpu_custom_call.1} parent=5 // pred_region
        %s123 = ssub.s32 %s15, 1
        // Predicated region
        $region13: #{tpu_custom_call.1} parent=11 // pred_check
          %p124 = pneg %p62
        $region14: #{tpu_custom_call.1} parent=11 // pred_check_branch
          %126 = sbr.rel (%p124) target = $region16
        $region15: #{tpu_custom_call.1} parent=11 // pred_region
          _
        $region16: #{tpu_custom_call.1} parent=11 // pred_fallthru
          _
        // Predicated region
        $region17: #{tpu_custom_call.1} parent=11 // pred_check
          %p127 = pneg %p83
        $region18: #{tpu_custom_call.1} parent=11 // pred_check_branch
          %129 = sbr.rel (%p127) target = $region20
        $region19: #{tpu_custom_call.1} parent=11 // pred_region
          _
        $region20: #{tpu_custom_call.1} parent=11 // pred_fallthru
          _
      $region12: #{tpu_custom_call.1} parent=5 // pred_fallthru
        _
      %p130 = scmp.lt.s32.totalorder %s15, 2
      // Predicated region
      $region21: #{tpu_custom_call.1} parent=5 // pred_check
        %p131 = pneg %p130
      $region22: #{tpu_custom_call.1} parent=5 // pred_check_branch
        %133 = sbr.rel (%p131) target = $region24
      $region23: #{tpu_custom_call.1} parent=5 // pred_region
        // Predicated region
        $region25: #{tpu_custom_call.1} parent=23 // pred_check
          %p134 = pneg %p35
        $region26: #{tpu_custom_call.1} parent=23 // pred_check_branch
          %136 = sbr.rel (%p134) target = $region28
        $region27: #{tpu_custom_call.1} parent=23 // pred_region
          %s137 = sand.u32 %s25, 1
          %s138 = scalar_lea.sflag [#allocation3], %s137
          %s139 = sand.u32 %s25, 1
          %s140 = smul.addr %s139, 64
          %s141 = scalar_lea.vmem [#allocation2], %s140
          %s143 = ssub.s32 1024, 1024
          %144 = vsyncadd %s138, %s143
          %s145 = smul.addr %s15, 8
          %s146 = smul.addr %s145, 128
          %s147 = scalar_lea.hbm %s0, %s146
          %s148 = sshll.u32 %s141, 4
          %s149 = int_to_ptr.vmem [resolvable:$true] %s148
          %154 = dma.hbm_to_vmem [thread:$0]  %s147, 1024, %s149, %s138, 256, 256, 16
        $region28: #{tpu_custom_call.1} parent=23 // pred_fallthru
          _
      $region24: #{tpu_custom_call.1} parent=5 // pred_fallthru
        _
      %p155 = scmp.le.s32.totalorder 1, %s15
      %p156 = scmp.lt.s32.totalorder %s15, 3
      %p157 = pnand %p155, %p156
      %p158 = pneg %p157
      // Predicated region
      $region29: #{tpu_custom_call.1} parent=5 // pred_check
        _
      $region30: #{tpu_custom_call.1} parent=5 // pred_check_branch
        %160 = sbr.rel (%p157) target = $region32
      $region31: #{tpu_custom_call.1} parent=5 // pred_region
        %s161 = ssub.s32 %s15, 1
        %s162 = sand.u32 %s28, 1
        %s163 = scalar_lea.sflag [#allocation3], %s162
        %s164 = sand.u32 %s28, 1
        %s165 = smul.addr %s164, 64
        %s166 = scalar_lea.vmem [#allocation2], %s165
        // Predicated region
        $region33: #{tpu_custom_call.1} parent=31 // pred_check
          %p167 = pneg %p41
        $region34: #{tpu_custom_call.1} parent=31 // pred_check_branch
          %169 = sbr.rel (%p167) target = $region36
        $region35: #{tpu_custom_call.1} parent=31 // pred_region
          %170 = dma.done %s163, 1024
        $region36: #{tpu_custom_call.1} parent=31 // pred_fallthru
          _
        %s171 = sand.u32 %s28, 1
        %s172 = scalar_lea.sflag [#allocation3], %s171
        %s173 = sand.u32 %s28, 1
        %s174 = smul.addr %s173, 64
        %s175 = scalar_lea.vmem [#allocation2], %s174
        %p176 = pneg %p41
        %p177 = pneg %p38
        %p178 = pneg %p62
        %p179 = pneg %p59
        %p180 = pneg %p83
        %p181 = pneg %p80
        %p182 = pneg %p109
        %p183 = pneg %p106
        %s184 = sand.u32 %s96, 1
        %s185 = scalar_lea.sflag [#allocation4], %s184
        %s186 = sand.u32 %s96, 1
        %s187 = smul.addr %s186, 64
        %s188 = scalar_lea.vmem [#allocation5], %s187
        %v189 = vld [vmem:[%s166] sm:$0xff]
        %v190 = vld [vmem:[%s166 + $0x8] sm:$0xff]
        %v191 = vld [vmem:[%s166 + $0x10] sm:$0xff]
        %v192 = vld [vmem:[%s166 + $0x18] sm:$0xff]
        %v193 = vld [vmem:[%s166 + $0x20] sm:$0xff]
        %v194 = vld [vmem:[%s166 + $0x28] sm:$0xff]
        %v195 = vld [vmem:[%s166 + $0x30] sm:$0xff]
        %v196 = vld [vmem:[%s166 + $0x38] sm:$0xff]
        %v197 = vadd.f32 %v189, %v191
        %v198 = vadd.f32 %v197, %v193
        %v199 = vadd.f32 %v198, %v195
        %v200 = vadd.f32 %v190, %v192
        %v201 = vadd.f32 %v200, %v194
        %v202 = vadd.f32 %v201, %v196
        %v203 = vadd.f32 %v199, %v202
        %204 = vadd.xlane.f32.xlu0 %v203
        %v205 = vpop.xlane.xlu0 %204
        %v206 = vmul.f32 %v205, 0.0009765625
        %v207 = vld [vmem:[%s1] sm:$0xff]
        %v208 = vmul.f32 %v206, %v207
        %vm209 = vcmask 31744
        %v210 = vsel %vm209, %v208, 0.0
        %v211 = vrot.slane %v210, 4
        %v212 = vadd.f32 %v210, %v211
        %v213 = vrot.slane %v212, 2
        %v214 = vadd.f32 %v212, %v213
        %v215 = vrot.slane %v214, 1
        %v216 = vadd.f32 %v214, %v215
        %v217 = vmax.f32 %v216, 0.0
        %v218 = vld [vmem:[%s2] sm:$0xff]
        %v219 = vmul.f32 %v217, %v218
        %v220 = vsel %vm209, %v219, 0.0
        %221 = vadd.xlane.f32.xlu0 %v220
        %v222 = vpop.xlane.xlu0 %221
        %v223 = vxor.u32 %v222, 2147483648
        %v224 = vmul.f32 %v223, 1.442695
        %v225 = vpow.pop %v224
        %v226 = vadd.f32 %v225, 1.0
        %v227 = vrcp.pop %v226
        %v228 = vmul.f32 1.0, %v227
        %v229 = vadd.f32 %v228, 0.5
        %v230 = vmul.f32 %v189, %v229
        %v231 = vmul.f32 %v190, %v229
        %v232 = vmul.f32 %v191, %v229
        %v233 = vmul.f32 %v192, %v229
        %v234 = vmul.f32 %v193, %v229
        %v235 = vmul.f32 %v194, %v229
        %v236 = vmul.f32 %v195, %v229
        %v237 = vmul.f32 %v196, %v229
        %238 = vst [vmem:[%s188] sm:$0xff] %v230
        %239 = vst [vmem:[%s188 + $0x8] sm:$0xff] %v231
        %240 = vst [vmem:[%s188 + $0x10] sm:$0xff] %v232
        %241 = vst [vmem:[%s188 + $0x18] sm:$0xff] %v233
        %242 = vst [vmem:[%s188 + $0x20] sm:$0xff] %v234
        %243 = vst [vmem:[%s188 + $0x28] sm:$0xff] %v235
        %244 = vst [vmem:[%s188 + $0x30] sm:$0xff] %v236
        %245 = vst [vmem:[%s188 + $0x38] sm:$0xff] %v237
        %s246 = sand.u32 %s96, 1
        %s247 = scalar_lea.sflag [#allocation4], %s246
        %s248 = sand.u32 %s96, 1
        %s249 = smul.addr %s248, 64
        %s250 = scalar_lea.vmem [#allocation5], %s249
        // Predicated region
        $region37: #{tpu_custom_call.1} parent=31 // pred_check
          %p251 = pneg %p106
        $region38: #{tpu_custom_call.1} parent=31 // pred_check_branch
          %253 = sbr.rel (%p251) target = $region40
        $region39: #{tpu_custom_call.1} parent=31 // pred_region
          %s255 = ssub.s32 1024, 1024
          %256 = vsyncadd %s247, %s255
          %s257 = smul.addr %s20, 8
          %s258 = smul.addr %s257, 128
          %s259 = scalar_lea.hbm %s3, %s258
          %s260 = sshll.u32 %s250, 4
          %s261 = int_to_ptr.vmem [resolvable:$true] %s260
          %266 = dma.vmem_to_hbm [thread:$0]  %s261, 1024, %s259, %s247, 256, 256, 16
        $region40: #{tpu_custom_call.1} parent=31 // pred_fallthru
          _
      $region32: #{tpu_custom_call.1} parent=5 // pred_fallthru
        _
      %p267 = scmp.le.s32.totalorder 2, %s15
      // Predicated region
      $region41: #{tpu_custom_call.1} parent=5 // pred_check
        %p268 = pneg %p267
      $region42: #{tpu_custom_call.1} parent=5 // pred_check_branch
        %270 = sbr.rel (%p268) target = $region44
      $region43: #{tpu_custom_call.1} parent=5 // pred_region
        %s271 = ssub.s32 %s15, 2
        // Predicated region
        $region45: #{tpu_custom_call.1} parent=43 // pred_check
          %p272 = pneg %p112
        $region46: #{tpu_custom_call.1} parent=43 // pred_check_branch
          %274 = sbr.rel (%p272) target = $region48
        $region47: #{tpu_custom_call.1} parent=43 // pred_region
          %s275 = sand.u32 %s97, 1
          %s276 = scalar_lea.sflag [#allocation4], %s275
          %s277 = sand.u32 %s97, 1
          %s278 = smul.addr %s277, 64
          %s279 = scalar_lea.vmem [#allocation5], %s278
          %280 = dma.done %s276, 1024
        $region48: #{tpu_custom_call.1} parent=43 // pred_fallthru
          _
      $region44: #{tpu_custom_call.1} parent=5 // pred_fallthru
        _
    $region6: #{tpu_custom_call.1} parent=1 // loop_footer
      %s19 = sadd.s32 1, %s15
    $region7: #{tpu_custom_call.1} parent=1 // loop_footer_branch
      %14 = sbr.rel target = $region3
    $region8: #{tpu_custom_call.1} parent=1 // loop_exit
      _
    %281 = vsyncpa [#allocation3], 1
    %s282 = scalar_lea.sflag [#allocation3], 1
    %283 = vsyncpa %s282, 1
    %284 = vsyncpa [#allocation4], 1
    %s285 = scalar_lea.sflag [#allocation4], 1
    %286 = vsyncpa %s285, 1

</llo_original>
